<compile_context>
chip_gen: v6e
topology: v6e:2x2x1
jax: 0.10.0
libtpu: 0.0.40
codegen_flags: <defaults>
</compile_context>

<pallas_src>
import jax
import jax.numpy as jnp
from jax import lax
from jax.experimental import pallas as pl
from jax.experimental.pallas import tpu as pltpu


def _round_up(a, b):
    return ((a + b - 1) // b) * b


def _make_ffn_kernel(d_valid, d_pad):
    """Kernel closure over the true feature dim (for masked LN statistics)."""
    needs_mask = d_valid != d_pad
    inv_d = 1.0 / float(d_valid)

    def kernel(x_ref, w1_ref, w2_ref, vec_ref, o_ref):
        x = x_ref[...]                           # [TM, Dp], native dtype
        b1 = vec_ref[0:1, :]                     # [1, Dp] f32 (static row slices)
        b2 = vec_ref[1:2, :]
        gamma = vec_ref[2:3, :]
        beta = vec_ref[3:4, :]

        # x @ W^T with the PyTorch [out, in] weight layout consumed directly:
        # both operands contract on their last (lane) dim -> MXU-native,
        # no in-kernel or wrapper-side transpose. f32 accumulation.
        dn = (((1,), (1,)), ((), ()))
        h = lax.dot_general(x, w1_ref[...], dn,
                            preferred_element_type=jnp.float32) + b1
        h = jnp.maximum(h, 0.0)
        y = lax.dot_general(h.astype(w2_ref.dtype), w2_ref[...], dn,
                            preferred_element_type=jnp.float32) + b2

        # Residual + LayerNorm in f32 (population variance, eps=1e-5).
        # Padded feature lanes of z are exactly 0 (zero-padded x, weights,
        # biases), so sums over all lanes equal sums over valid lanes; we
        # divide by the true d_model and mask padded lanes for the variance.
        z = x.astype(jnp.float32) + y
        mean = jnp.sum(z, axis=-1, keepdims=True) * inv_d
        zc = z - mean
        if needs_mask:
            lane = lax.broadcasted_iota(jnp.int32, zc.shape, 1)
            zc_stat = jnp.where(lane < d_valid, zc, 0.0)
        else:
            zc_stat = zc
        var = jnp.sum(zc_stat * zc_stat, axis=-1, keepdims=True) * inv_d
        inv = lax.rsqrt(var + 1e-5)
        o_ref[...] = (zc * inv * gamma + beta).astype(o_ref.dtype)

    return kernel


def _device_plan(d_pad, x_bytes, w_bytes):
    """Generation-aware (vmem_limit_bytes, tm_target, min_tiles)."""
    try:
        vmem_phys = int(pltpu.get_tpu_info().vmem_capacity_bytes)
    except Exception:
        vmem_phys = 64 << 20                     # conservative: assume smallest (v7x)

    if vmem_phys >= (100 << 20):                 # v5e / v6e: 128 MiB physical
        vmem_limit = 104 << 20
        tm_target = 1024
        min_tiles = 2                            # single TC: 2 steps for pipelining
    else:                                        # v7x: 64 MiB physical, leave headroom
        vmem_limit = 48 << 20
        tm_target = 512
        min_tiles = 4                            # 2 TCs: >= 2 tiles per core

    weights = 2 * d_pad * d_pad * w_bytes        # Buffered(1): one copy of each weight
    vectors = 8 * d_pad * 4                      # [4, Dp] f32 block pads to 8 sublanes
    headroom = 4 << 20                           # compiler internal scratch, sems, ...

    def usage(tm):
        io = 2 * 2 * tm * d_pad * x_bytes        # x + out tiles, double buffered
        inter = 2 * tm * d_pad * 4               # f32 h and z intermediates
        return weights + vectors + io + inter + headroom

    while tm_target > 8 and usage(tm_target) > vmem_limit:
        tm_target //= 2
    # TODO(synk): if the two resident D x D weights alone exceed the budget
    # (e.g. bf16 D >~ 3k on v7x), tile the weights with an extra grid axis
    # instead of keeping them fully resident.
    return vmem_limit, tm_target, min_tiles


def _choose_tm(n, tm_target, min_tiles):
    """Balanced, MXU/sublane-aligned token tile with >= min_tiles grid steps."""
    n_tiles = max(-(-n // tm_target), min_tiles)
    tm = -(-n // n_tiles)
    if tm >= 512:
        tm = _round_up(tm, 256)
    elif tm >= 128:
        tm = _round_up(tm, 128)
    else:
        tm = _round_up(tm, 8)
    return max(tm, 8)


def ffn_pallas(x, w1, b1, w2, b2, gamma, beta, *, use_bf16_matmul=False):
    """x: [..., d_model]. PyTorch conventions: w1, w2: [d_model, d_model]
    (y = x @ W.T + b); b1, b2, gamma, beta: [d_model]."""
    d_model = x.shape[-1]
    lead = x.shape[:-1]
    x2d = x.reshape((-1, d_model))
    n = x2d.shape[0]

    if use_bf16_matmul:
        # Optional throughput lever for f32 models: bf16 MXU operands with f32
        # accumulation + f32 residual/LN epilogue (slightly different numerics).
        x2d = x2d.astype(jnp.bfloat16)
        w1 = w1.astype(jnp.bfloat16)
        w2 = w2.astype(jnp.bfloat16)

    # Lane-dense feature dim: pad D up to a multiple of 128 so stores are full
    # vst (not masked vst.msk) and the MXU slab is not starved. For production,
    # keep d_model a multiple of 128 so this padding is a no-op.
    d_pad = _round_up(d_model, 128)
    dp = d_pad - d_model
    if dp:
        x2d = jnp.pad(x2d, ((0, 0), (0, dp)))
        w1 = jnp.pad(w1, ((0, dp), (0, dp)))
        w2 = jnp.pad(w2, ((0, dp), (0, dp)))

    # Pack b1, b2, gamma, beta into one resident [4, Dp] f32 block (one DMA).
    vecs = jnp.stack([b1, b2, gamma, beta]).astype(jnp.float32)
    if dp:
        vecs = jnp.pad(vecs, ((0, 0), (0, dp)))

    x_bytes = x2d.dtype.itemsize
    w_bytes = w1.dtype.itemsize
    vmem_limit, tm_target, min_tiles = _device_plan(d_pad, x_bytes, w_bytes)

    tm = _choose_tm(n, tm_target, min_tiles)
    n_pad = _round_up(n, tm)
    if n_pad != n:
        # Padded zero rows run through the whole pipeline (their LN hits var=0
        # -> rsqrt(1e-5)); harmless because they are sliced off below. Never
        # read the padded region of the raw kernel output.
        x2d = jnp.pad(x2d, ((0, n_pad - n), (0, 0)))
    grid = (n_pad // tm,)

    cost = pl.CostEstimate(
        flops=4 * n_pad * d_pad * d_pad,                     # two D x D matmuls
        transcendentals=n_pad,                               # one rsqrt per row
        bytes_accessed=(2 * n_pad * d_pad) * x_bytes         # x in + out
        + 2 * d_pad * d_pad * w_bytes                        # both weights, once
        + 4 * d_pad * 4,                                     # packed vectors
    )

    kernel = _make_ffn_kernel(d_model, d_pad)

    out2d = pl.pallas_call(
        kernel,
        out_shape=jax.ShapeDtypeStruct((n_pad, d_pad), x.dtype),
        grid=grid,
        in_specs=[
            pl.BlockSpec((tm, d_pad), lambda i: (i, 0)),                 # x tile (pipelined)
            pl.BlockSpec((d_pad, d_pad), lambda i: (0, 0),
                         pipeline_mode=pl.Buffered(1)),                  # W1 (resident, 1 copy)
            pl.BlockSpec((d_pad, d_pad), lambda i: (0, 0),
                         pipeline_mode=pl.Buffered(1)),                  # W2 (resident, 1 copy)
            pl.BlockSpec((4, d_pad), lambda i: (0, 0),
                         pipeline_mode=pl.Buffered(1)),                  # b1/b2/gamma/beta
        ],
        out_specs=pl.BlockSpec((tm, d_pad), lambda i: (i, 0)),
        compiler_params=pltpu.CompilerParams(
            dimension_semantics=("parallel",),   # shard token tiles across TCs (v7x)
            vmem_limit_bytes=vmem_limit,         # generation-aware, below physical
        ),
        cost_estimate=cost,
    )(x2d, w1, w2, vecs)

    out2d = out2d[:n, :d_model]
    return out2d.reshape(lead + (d_model,)).astype(x.dtype)


def ffn_reference(x, w1, b1, w2, b2, gamma, beta):
    h = jnp.maximum(x @ w1.T + b1, 0.0)
    y = h @ w2.T + b2
    z = x + y
    mean = jnp.mean(z, axis=-1, keepdims=True)
    var = jnp.mean((z - mean) ** 2, axis=-1, keepdims=True)
    return (z - mean) / jnp.sqrt(var + 1e-5) * gamma + beta


if __name__ == "__main__":
    d_model = 32
    seq, batch = 8, 2

    key = jax.random.PRNGKey(0)
    kx, kw1, kb1, kw2, kb2 = jax.random.split(key, 5)

    # Deterministic synthetic parameters (shapes from nn.Linear / nn.LayerNorm).
    x = jax.random.normal(kx, (seq, batch, d_model), dtype=jnp.float32)
    bound = 1.0 / jnp.sqrt(d_model)
    w1 = jax.random.uniform(kw1, (d_model, d_model), jnp.float32, -bound, bound)
    b1 = jax.random.uniform(kb1, (d_model,), jnp.float32, -bound, bound)
    w2 = jax.random.uniform(kw2, (d_model, d_model), jnp.float32, -bound, bound)
    b2 = jax.random.uniform(kb2, (d_model,), jnp.float32, -bound, bound)
    gamma = jnp.ones((d_model,), jnp.float32)   # LayerNorm default init
    beta = jnp.zeros((d_model,), jnp.float32)

    out = jax.block_until_ready(ffn_pallas(x, w1, b1, w2, b2, gamma, beta))
    ref = ffn_reference(x, w1, b1, w2, b2, gamma, beta)

    assert out.shape == x.shape, (out.shape, x.shape)
    assert jnp.allclose(out, ref, atol=1e-5, rtol=1e-5), float(jnp.max(jnp.abs(out - ref)))
    print("KERNEL_OK")
</pallas_src>

<mosaic_0001>
module attributes {stable_mosaic.version = 11 : i64} {
  func.func @kernel(%arg0: i32, %arg1: memref<8x128xf32, #tpu.memory_space<vmem>>, %arg2: memref<128x128xf32, #tpu.memory_space<vmem>>, %arg3: memref<128x128xf32, #tpu.memory_space<vmem>>, %arg4: memref<4x128xf32, #tpu.memory_space<vmem>>, %arg5: memref<8x128xf32, #tpu.memory_space<vmem>>) attributes {dimension_semantics = [#tpu.dimension_semantics<parallel>], iteration_bounds = array<i64: 2>, scalar_prefetch = 0 : i64, scratch_operands = 0 : i64, tpu.core_type = #tpu.core_type<tc>, window_params = [{transform_indices = @transform_0, window_bounds = array<i64: 8, 128>}, {pipeline_mode = #tpu.pipeline_mode<synchronous>, transform_indices = @transform_1, window_bounds = array<i64: 128, 128>}, {pipeline_mode = #tpu.pipeline_mode<synchronous>, transform_indices = @transform_2, window_bounds = array<i64: 128, 128>}, {pipeline_mode = #tpu.pipeline_mode<synchronous>, transform_indices = @transform_3, window_bounds = array<i64: 4, 128>}, {transform_indices = @transform_4, window_bounds = array<i64: 8, 128>}]} {
    %c0 = arith.constant 0 : index
    %c0_0 = arith.constant 0 : index
    %0 = vector.load %arg1[%c0, %c0_0] : memref<8x128xf32, #tpu.memory_space<vmem>>, vector<8x128xf32>
    %c0_1 = arith.constant 0 : index
    %c0_2 = arith.constant 0 : index
    %1 = vector.load %arg4[%c0_1, %c0_2] : memref<4x128xf32, #tpu.memory_space<vmem>>, vector<1x128xf32>
    %c1 = arith.constant 1 : index
    %c0_3 = arith.constant 0 : index
    %2 = vector.load %arg4[%c1, %c0_3] : memref<4x128xf32, #tpu.memory_space<vmem>>, vector<1x128xf32>
    %c2 = arith.constant 2 : index
    %c0_4 = arith.constant 0 : index
    %3 = vector.load %arg4[%c2, %c0_4] : memref<4x128xf32, #tpu.memory_space<vmem>>, vector<1x128xf32>
    %c3 = arith.constant 3 : index
    %c0_5 = arith.constant 0 : index
    %4 = vector.load %arg4[%c3, %c0_5] : memref<4x128xf32, #tpu.memory_space<vmem>>, vector<1x128xf32>
    %c0_6 = arith.constant 0 : index
    %c0_7 = arith.constant 0 : index
    %5 = vector.load %arg2[%c0_6, %c0_7] : memref<128x128xf32, #tpu.memory_space<vmem>>, vector<128x128xf32>
    %cst = arith.constant dense<0.000000e+00> : vector<8x128xf32>
    %6 = tpu.matmul %0, %5, %cst {dimension_numbers = #tpu.dot_dimension_numbers<[1], [1], [0], [0], [0, 0, 1, 0], [], []>} : vector<8x128xf32>, vector<128x128xf32>, vector<8x128xf32> -> vector<8x128xf32>
    %7 = vector.broadcast %1 : vector<1x128xf32> to vector<8x128xf32>
    %8 = arith.addf %6, %7 : vector<8x128xf32>
    %cst_8 = arith.constant 0.000000e+00 : f32
    %9 = vector.broadcast %cst_8 : f32 to vector<8x128xf32>
    %10 = arith.maximumf %8, %9 : vector<8x128xf32>
    %c0_9 = arith.constant 0 : index
    %c0_10 = arith.constant 0 : index
    %11 = vector.load %arg3[%c0_9, %c0_10] : memref<128x128xf32, #tpu.memory_space<vmem>>, vector<128x128xf32>
    %cst_11 = arith.constant dense<0.000000e+00> : vector<8x128xf32>
    %12 = tpu.matmul %10, %11, %cst_11 {dimension_numbers = #tpu.dot_dimension_numbers<[1], [1], [0], [0], [0, 0, 1, 0], [], []>} : vector<8x128xf32>, vector<128x128xf32>, vector<8x128xf32> -> vector<8x128xf32>
    %13 = vector.broadcast %2 : vector<1x128xf32> to vector<8x128xf32>
    %14 = arith.addf %12, %13 : vector<8x128xf32>
    %15 = arith.addf %0, %14 : vector<8x128xf32>
    %cst_12 = arith.constant dense<0.000000e+00> : vector<8xf32>
    %16 = vector.multi_reduction <add>, %15, %cst_12 [1] : vector<8x128xf32> to vector<8xf32>
    %17 = vector.shape_cast %16 : vector<8xf32> to vector<8x1xf32>
    %cst_13 = arith.constant 3.125000e-02 : f32
    %18 = vector.broadcast %cst_13 : f32 to vector<8x1xf32>
    %19 = arith.mulf %17, %18 : vector<8x1xf32>
    %20 = vector.broadcast %19 : vector<8x1xf32> to vector<8x128xf32>
    %21 = arith.subf %15, %20 : vector<8x128xf32>
    %22 = tpu.iota {dimensions = array<i32: 1>} : vector<8x128xi32>
    %c32_i32 = arith.constant 32 : i32
    %23 = vector.broadcast %c32_i32 : i32 to vector<8x128xi32>
    %24 = arith.cmpi slt, %22, %23 : vector<8x128xi32>
    %cst_14 = arith.constant 0.000000e+00 : f32
    %25 = vector.broadcast %cst_14 : f32 to vector<8x128xf32>
    %26 = arith.select %24, %21, %25 : vector<8x128xi1>, vector<8x128xf32>
    %27 = arith.mulf %26, %26 : vector<8x128xf32>
    %cst_15 = arith.constant dense<0.000000e+00> : vector<8xf32>
    %28 = vector.multi_reduction <add>, %27, %cst_15 [1] : vector<8x128xf32> to vector<8xf32>
    %29 = vector.shape_cast %28 : vector<8xf32> to vector<8x1xf32>
    %cst_16 = arith.constant 3.125000e-02 : f32
    %30 = vector.broadcast %cst_16 : f32 to vector<8x1xf32>
    %31 = arith.mulf %29, %30 : vector<8x1xf32>
    %cst_17 = arith.constant 9.99999974E-6 : f32
    %32 = vector.broadcast %cst_17 : f32 to vector<8x1xf32>
    %33 = arith.addf %31, %32 : vector<8x1xf32>
    %34 = math.rsqrt %33 : vector<8x1xf32>
    %35 = vector.broadcast %34 : vector<8x1xf32> to vector<8x128xf32>
    %36 = arith.mulf %21, %35 : vector<8x128xf32>
    %37 = vector.broadcast %3 : vector<1x128xf32> to vector<8x128xf32>
    %38 = arith.mulf %36, %37 : vector<8x128xf32>
    %39 = vector.broadcast %4 : vector<1x128xf32> to vector<8x128xf32>
    %40 = arith.addf %38, %39 : vector<8x128xf32>
    %c0_18 = arith.constant 0 : index
    %c0_19 = arith.constant 0 : index
    %41 = vector.load %arg5[%c0_18, %c0_19] : memref<8x128xf32, #tpu.memory_space<vmem>>, vector<8x128xf32>
    tpu.vector_store %arg5[%c0_18, %c0_19], %40 {strides = array<i32>} : memref<8x128xf32, #tpu.memory_space<vmem>>, vector<8x128xf32>,
    return
  }
  func.func @transform_0(%arg0: i32) -> (i32, i32) {
    %c0_i32 = arith.constant 0 : i32
    %c0_i32_0 = arith.constant 0 : i32
    return %arg0, %c0_i32 : i32, i32
  }
  func.func @transform_1(%arg0: i32) -> (i32, i32) {
    %c0_i32 = arith.constant 0 : i32
    %c0_i32_0 = arith.constant 0 : i32
    %c0_i32_1 = arith.constant 0 : i32
    return %c0_i32, %c0_i32_0 : i32, i32
  }
  func.func @transform_2(%arg0: i32) -> (i32, i32) {
    %c0_i32 = arith.constant 0 : i32
    %c0_i32_0 = arith.constant 0 : i32
    %c0_i32_1 = arith.constant 0 : i32
    return %c0_i32, %c0_i32_0 : i32, i32
  }
  func.func @transform_3(%arg0: i32) -> (i32, i32) {
    %c0_i32 = arith.constant 0 : i32
    %c0_i32_0 = arith.constant 0 : i32
    %c0_i32_1 = arith.constant 0 : i32
    return %c0_i32, %c0_i32_0 : i32, i32
  }
  func.func @transform_4(%arg0: i32) -> (i32, i32) {
    %c0_i32 = arith.constant 0 : i32
    %c0_i32_0 = arith.constant 0 : i32
    return %arg0, %c0_i32 : i32, i32
  }
}

</mosaic_0001>

<llo_original>
// kernel: tpu_custom_call.1
$region0: #{tpu_custom_call.1}
  #allocation0 [shape = 'u32[]', space=smem, size = 0x4, offset = 0x4, fixed_abs, tag = 'smem constant byte address 0x4 - core index']
  #allocation1 [shape = 'u32[144,128]{1,0:T(1,128)}', space=vmem, size = 0x12000, scoped, tag = 'internal scratch']
  %s0 = inlined_call_operand.hbm [shape: f32[16,128], index: 0, kind: input, shape index: {}]
  %s1 = inlined_call_operand.hbm [shape: f32[128,128], index: 1, kind: input, shape index: {}]
  %s2 = inlined_call_operand.hbm [shape: f32[128,128], index: 2, kind: input, shape index: {}]
  %s3 = inlined_call_operand.vmem [shape: f32[4,128], index: 3, kind: input, shape index: {}]
  %s4 = inlined_call_operand.hbm [shape: f32[16,128], index: 4, kind: output, shape index: {}]
  %s5 = sld [smem:[#allocation0]]
  $region61: #{tpu_custom_call.1} parent=0
    _
  %s7 = ssub.s32 1, %s5
  %s8 = scalar_select 0, %s7, %s5
  $region1: #{tpu_custom_call.1} parent=0
    #allocation2 [shape = 'u8[8192]{0}', space=vmem, size = 0x2000, scoped, tag = 'input window, operand 0']
    #allocation3 [shape = 's32[2]{0}', space=sflag, size = 0x8, scoped, tag = 'scoped memory for tpu_custom_call.1']
    #allocation4 [shape = 's32[2]{0}', space=sflag, size = 0x8, scoped, tag = 'scoped memory for tpu_custom_call.1']
    #allocation5 [shape = 'u8[65536]{0}', space=vmem, size = 0x10000, scoped, tag = 'input window, operand 1, single buffered']
    #allocation6 [shape = 's32[1]{0}', space=sflag, size = 0x4, scoped, tag = 'scoped memory for tpu_custom_call.1']
    #allocation7 [shape = 'u8[65536]{0}', space=vmem, size = 0x10000, scoped, tag = 'input window, operand 2, single buffered']
    #allocation8 [shape = 'u8[8192]{0}', space=vmem, size = 0x2000, scoped, tag = 'output window, operand 0']
    %9 = vsyncpa [#allocation3], 0
    %s10 = scalar_lea.sflag [#allocation3], 1
    %11 = vsyncpa %s10, 0
    %12 = vsyncpa [#allocation6], 0
    %13 = vsyncpa [#allocation4], 0
    %s14 = scalar_lea.sflag [#allocation4], 1
    %15 = vsyncpa %s14, 0
    loop: start=0, step=1, limit=4
    $region2: #{tpu_custom_call.1} parent=1 // loop_pre_header
      _
    $region3: #{tpu_custom_call.1} parent=1 // loop_header
      %s17 = sphi 0, %s21
      %p18 = scmp.ge.s32.totalorder %s17, 4
      %s27 = sphi 0, %s29
      %s30 = sphi 0, %s27
      %s31 = sphi 0, %s30
      %s47 = sphi 0, %s31
      %s51 = sphi 0, %s51
      %s53 = sphi 0, %s51
      %s54 = sphi 0, %s53
      %s68 = sphi 0, %s54
      %s72 = sphi 0, %s72
      %s74 = sphi 0, %s72
      %s75 = sphi 0, %s74
      %s89 = sphi 0, %s75
      %s93 = sphi 0, %s93
      %s95 = sphi 0, %s93
      %s96 = sphi 0, %s95
      %s110 = sphi 0, %s96
      %s116 = sphi 0, %s118
      %s119 = sphi 0, %s116
      %s120 = sphi 0, %s119
      %s136 = sphi 0, %s120
    $region4: #{tpu_custom_call.1} parent=1 // loop_header_branch
      %20 = sbr.rel (%p18) target = $region8
    $region5: #{tpu_custom_call.1} parent=1 // loop_body
      %s22 = ssub.s32 %s17, 1
      %s23 = ssub.s32 %s17, 2
      %s24 = sadd.s32 %s17, 1
      %s25 = ssub.s32 %s17, %s24
      %p26 = scmp.eq.s32.totalorder %s25, 0
      %s28 = sadd.s32 %s27, 1
      %s29 = scalar_select %p26, %s27, %s28
      %p32 = pneg %p26
      %p33 = scmp.eq.s32.totalorder %s17, 1
      %p34 = por %p32, %p33
      %p35 = scmp.ne.s32.totalorder %s27, %s30
      %p36 = scmp.eq.s32.totalorder %s17, 0
      %p37 = por %p35, %p36
      %p38 = scmp.ne.s32.totalorder %s27, %s30
      %p39 = scmp.eq.s32.totalorder %s22, 1
      %p40 = por %p38, %p39
      %p41 = scmp.ne.s32.totalorder %s30, %s31
      %p42 = scmp.eq.s32.totalorder %s22, 0
      %p43 = por %p41, %p42
      %p44 = scmp.ne.s32.totalorder %s30, %s31
      %p45 = scmp.eq.s32.totalorder %s23, 1
      %p46 = por %p44, %p45
      %p48 = scmp.ne.s32.totalorder %s31, %s47
      %p49 = scmp.eq.s32.totalorder %s23, 0
      %p50 = por %p48, %p49
      %s52 = sadd.s32 %s51, 1
      %p55 = scmp.eq.s32.totalorder %s17, 1
      %p56 = scmp.ne.s32.totalorder %s51, %s53
      %p57 = scmp.eq.s32.totalorder %s17, 0
      %p58 = por %p56, %p57
      %p59 = scmp.ne.s32.totalorder %s51, %s53
      %p60 = scmp.eq.s32.totalorder %s22, 1
      %p61 = por %p59, %p60
      %p62 = scmp.ne.s32.totalorder %s53, %s54
      %p63 = scmp.eq.s32.totalorder %s22, 0
      %p64 = por %p62, %p63
      %p65 = scmp.ne.s32.totalorder %s53, %s54
      %p66 = scmp.eq.s32.totalorder %s23, 1
      %p67 = por %p65, %p66
      %p69 = scmp.ne.s32.totalorder %s54, %s68
      %p70 = scmp.eq.s32.totalorder %s23, 0
      %p71 = por %p69, %p70
      %s73 = sadd.s32 %s72, 1
      %p76 = scmp.eq.s32.totalorder %s17, 1
      %p77 = scmp.ne.s32.totalorder %s72, %s74
      %p78 = scmp.eq.s32.totalorder %s17, 0
      %p79 = por %p77, %p78
      %p80 = scmp.ne.s32.totalorder %s72, %s74
      %p81 = scmp.eq.s32.totalorder %s22, 1
      %p82 = por %p80, %p81
      %p83 = scmp.ne.s32.totalorder %s74, %s75
      %p84 = scmp.eq.s32.totalorder %s22, 0
      %p85 = por %p83, %p84
      %p86 = scmp.ne.s32.totalorder %s74, %s75
      %p87 = scmp.eq.s32.totalorder %s23, 1
      %p88 = por %p86, %p87
      %p90 = scmp.ne.s32.totalorder %s75, %s89
      %p91 = scmp.eq.s32.totalorder %s23, 0
      %p92 = por %p90, %p91
      %s94 = sadd.s32 %s93, 1
      %p97 = scmp.eq.s32.totalorder %s17, 1
      %p98 = scmp.ne.s32.totalorder %s93, %s95
      %p99 = scmp.eq.s32.totalorder %s17, 0
      %p100 = por %p98, %p99
      %p101 = scmp.ne.s32.totalorder %s93, %s95
      %p102 = scmp.eq.s32.totalorder %s22, 1
      %p103 = por %p101, %p102
      %p104 = scmp.ne.s32.totalorder %s95, %s96
      %p105 = scmp.eq.s32.totalorder %s22, 0
      %p106 = por %p104, %p105
      %p107 = scmp.ne.s32.totalorder %s95, %s96
      %p108 = scmp.eq.s32.totalorder %s23, 1
      %p109 = por %p107, %p108
      %p111 = scmp.ne.s32.totalorder %s96, %s110
      %p112 = scmp.eq.s32.totalorder %s23, 0
      %p113 = por %p111, %p112
      %s114 = ssub.s32 %s17, %s24
      %p115 = scmp.eq.s32.totalorder %s114, 0
      %s117 = sadd.s32 %s116, 1
      %s118 = scalar_select %p115, %s116, %s117
      %p121 = pneg %p115
      %p122 = scmp.eq.s32.totalorder %s17, 1
      %p123 = por %p121, %p122
      %p124 = scmp.ne.s32.totalorder %s116, %s119
      %p125 = scmp.eq.s32.totalorder %s17, 0
      %p126 = por %p124, %p125
      %p127 = scmp.ne.s32.totalorder %s116, %s119
      %p128 = scmp.eq.s32.totalorder %s22, 1
      %p129 = por %p127, %p128
      %p130 = scmp.ne.s32.totalorder %s119, %s120
      %p131 = scmp.eq.s32.totalorder %s22, 0
      %p132 = por %p130, %p131
      %p133 = scmp.ne.s32.totalorder %s119, %s120
      %p134 = scmp.eq.s32.totalorder %s23, 1
      %p135 = por %p133, %p134
      %p137 = scmp.ne.s32.totalorder %s120, %s136
      %p138 = scmp.eq.s32.totalorder %s23, 0
      %p139 = por %p137, %p138
      %p140 = scmp.le.s32.totalorder 1, %s17
      %p141 = scmp.lt.s32.totalorder %s17, 3
      %p142 = pnand %p140, %p141
      %p143 = pneg %p142
      // Predicated region
      $region9: #{tpu_custom_call.1} parent=5 // pred_check
        _
      $region10: #{tpu_custom_call.1} parent=5 // pred_check_branch
        %145 = sbr.rel (%p142) target = $region12
      $region11: #{tpu_custom_call.1} parent=5 // pred_region
        %s146 = ssub.s32 %s17, 1
        // Predicated region
        $region13: #{tpu_custom_call.1} parent=11 // pred_check
          %p147 = pneg %p64
        $region14: #{tpu_custom_call.1} parent=11 // pred_check_branch
          %149 = sbr.rel (%p147) target = $region16
        $region15: #{tpu_custom_call.1} parent=11 // pred_region
          %s151 = ssub.s32 2048, 2048
          %152 = vsyncadd [#allocation6], %s151
          %s153 = sshll.u32 [#allocation5], 4
          %s154 = int_to_ptr.vmem [resolvable:$true] %s153
          %159 = dma.hbm_to_vmem [thread:$0]  %s1, 2048, %s154, [#allocation6], 128, 128, 8
        $region16: #{tpu_custom_call.1} parent=11 // pred_fallthru
          _
        // Predicated region
        $region17: #{tpu_custom_call.1} parent=11 // pred_check
          %p160 = pneg %p85
        $region18: #{tpu_custom_call.1} parent=11 // pred_check_branch
          %162 = sbr.rel (%p160) target = $region20
        $region19: #{tpu_custom_call.1} parent=11 // pred_region
          %s164 = ssub.s32 2048, 2048
          %165 = vsyncadd [#allocation6], %s164
          %s166 = sshll.u32 [#allocation7], 4
          %s167 = int_to_ptr.vmem [resolvable:$true] %s166
          %172 = dma.hbm_to_vmem [thread:$0]  %s2, 2048, %s167, [#allocation6], 128, 128, 8
        $region20: #{tpu_custom_call.1} parent=11 // pred_fallthru
          _
        // Predicated region
        $region21: #{tpu_custom_call.1} parent=11 // pred_check
          %p173 = pneg %p106
        $region22: #{tpu_custom_call.1} parent=11 // pred_check_branch
          %175 = sbr.rel (%p173) target = $region24
        $region23: #{tpu_custom_call.1} parent=11 // pred_region
          _
        $region24: #{tpu_custom_call.1} parent=11 // pred_fallthru
          _
      $region12: #{tpu_custom_call.1} parent=5 // pred_fallthru
        _
      %p176 = scmp.lt.s32.totalorder %s17, 2
      // Predicated region
      $region25: #{tpu_custom_call.1} parent=5 // pred_check
        %p177 = pneg %p176
      $region26: #{tpu_custom_call.1} parent=5 // pred_check_branch
        %179 = sbr.rel (%p177) target = $region28
      $region27: #{tpu_custom_call.1} parent=5 // pred_region
        // Predicated region
        $region29: #{tpu_custom_call.1} parent=27 // pred_check
          %p180 = pneg %p37
        $region30: #{tpu_custom_call.1} parent=27 // pred_check_branch
          %182 = sbr.rel (%p180) target = $region32
        $region31: #{tpu_custom_call.1} parent=27 // pred_region
          %s183 = sand.u32 %s27, 1
          %s184 = scalar_lea.sflag [#allocation3], %s183
          %s185 = sand.u32 %s27, 1
          %s186 = smul.addr %s185, 8
          %s187 = scalar_lea.vmem [#allocation2], %s186
          %s189 = ssub.s32 128, 128
          %190 = vsyncadd %s184, %s189
          %s191 = smul.addr %s17, 128
          %s192 = scalar_lea.hbm %s0, %s191
          %s194 = sshll.u32 %s187, 4
          %s195 = int_to_ptr.vmem [resolvable:$true] %s194
          %197 = dma.hbm_to_vmem [thread:$0]  %s192, 128, %s195, %s184
        $region32: #{tpu_custom_call.1} parent=27 // pred_fallthru
          _
      $region28: #{tpu_custom_call.1} parent=5 // pred_fallthru
        _
      %p198 = scmp.le.s32.totalorder 1, %s17
      %p199 = scmp.lt.s32.totalorder %s17, 3
      %p200 = pnand %p198, %p199
      %p201 = pneg %p200
      // Predicated region
      $region33: #{tpu_custom_call.1} parent=5 // pred_check
        _
      $region34: #{tpu_custom_call.1} parent=5 // pred_check_branch
        %203 = sbr.rel (%p200) target = $region36
      $region35: #{tpu_custom_call.1} parent=5 // pred_region
        %s204 = ssub.s32 %s17, 1
        %s205 = sand.u32 %s30, 1
        %s206 = scalar_lea.sflag [#allocation3], %s205
        %s207 = sand.u32 %s30, 1
        %s208 = smul.addr %s207, 8
        %s209 = scalar_lea.vmem [#allocation2], %s208
        // Predicated region
        $region37: #{tpu_custom_call.1} parent=35 // pred_check
          %p210 = pneg %p43
        $region38: #{tpu_custom_call.1} parent=35 // pred_check_branch
          %212 = sbr.rel (%p210) target = $region40
        $region39: #{tpu_custom_call.1} parent=35 // pred_region
          %213 = dma.done %s206, 128
        $region40: #{tpu_custom_call.1} parent=35 // pred_fallthru
          _
        // Predicated region
        $region41: #{tpu_custom_call.1} parent=35 // pred_check
          %p214 = pneg %p64
        $region42: #{tpu_custom_call.1} parent=35 // pred_check_branch
          %216 = sbr.rel (%p214) target = $region44
        $region43: #{tpu_custom_call.1} parent=35 // pred_region
          %217 = dma.done [#allocation6], 2048
        $region44: #{tpu_custom_call.1} parent=35 // pred_fallthru
          _
        // Predicated region
        $region45: #{tpu_custom_call.1} parent=35 // pred_check
          %p218 = pneg %p85
        $region46: #{tpu_custom_call.1} parent=35 // pred_check_branch
          %220 = sbr.rel (%p218) target = $region48
        $region47: #{tpu_custom_call.1} parent=35 // pred_region
          %221 = dma.done [#allocation6], 2048
        $region48: #{tpu_custom_call.1} parent=35 // pred_fallthru
          _
        %s222 = sand.u32 %s30, 1
        %s223 = scalar_lea.sflag [#allocation3], %s222
        %s224 = sand.u32 %s30, 1
        %s225 = smul.addr %s224, 8
        %s226 = scalar_lea.vmem [#allocation2], %s225
        %p227 = pneg %p43
        %p228 = pneg %p40
        %p229 = pneg %p64
        %p230 = pneg %p61
        %p231 = pneg %p85
        %p232 = pneg %p82
        %p233 = pneg %p106
        %p234 = pneg %p103
        %p235 = pneg %p132
        %p236 = pneg %p129
        %s237 = sand.u32 %s119, 1
        %s238 = scalar_lea.sflag [#allocation4], %s237
        %s239 = sand.u32 %s119, 1
        %s240 = smul.addr %s239, 8
        %s241 = scalar_lea.vmem [#allocation8], %s240
        %v242 = vld [vmem:[%s209] sm:$0xff]
        %v243 = vld [vmem:[%s3] sm:$0x1]
        %v244 = vld [vmem:[%s3 + $0x1] sm:$0x1]
        %v245 = vld [vmem:[%s3 + $0x2] sm:$0x1]
        %v246 = vld [vmem:[%s3 + $0x3] sm:$0x1]
        %v247 = vld [vmem:[#allocation5] sm:$0xff]
        %v248 = vld [vmem:[#allocation5 + $0x8] sm:$0xff]
        %v249 = vld [vmem:[#allocation5 + $0x10] sm:$0xff]
        %v250 = vld [vmem:[#allocation5 + $0x18] sm:$0xff]
        %v251 = vld [vmem:[#allocation5 + $0x20] sm:$0xff]
        %v252 = vld [vmem:[#allocation5 + $0x28] sm:$0xff]
        %v253 = vld [vmem:[#allocation5 + $0x30] sm:$0xff]
        %v254 = vld [vmem:[#allocation5 + $0x38] sm:$0xff]
        %v255 = vld [vmem:[#allocation5 + $0x40] sm:$0xff]
        %v256 = vld [vmem:[#allocation5 + $0x48] sm:$0xff]
        %v257 = vld [vmem:[#allocation5 + $0x50] sm:$0xff]
        %v258 = vld [vmem:[#allocation5 + $0x58] sm:$0xff]
        %v259 = vld [vmem:[#allocation5 + $0x60] sm:$0xff]
        %v260 = vld [vmem:[#allocation5 + $0x68] sm:$0xff]
        %v261 = vld [vmem:[#allocation5 + $0x70] sm:$0xff]
        %v262 = vld [vmem:[#allocation5 + $0x78] sm:$0xff]
        %v263 = vlaneseq
        %v264 = vshrl.u32 %v263, 7
        %v265 = vsub.s32 0, %v264
        %v266 = vrot.slane %v243, %v265
        %267 = vmatprep.subr.mxu0 0.0
        %268 = vmatpush1.xpose.msra.mxu0 %v262
        %269 = vmatprep.subr.mxu0 0.0
        %270 = vmatpush1.xpose.msra.mxu0 %v261
        %271 = vmatprep.subr.mxu0 0.0
        %272 = vmatpush1.xpose.msra.mxu0 %v260
        %273 = vmatprep.subr.mxu0 0.0
        %274 = vmatpush1.xpose.msra.mxu0 %v259
        %275 = vmatprep.subr.mxu0 0.0
        %276 = vmatpush1.xpose.msra.mxu0 %v258
        %277 = vmatprep.subr.mxu0 0.0
        %278 = vmatpush1.xpose.msra.mxu0 %v257
        %279 = vmatprep.subr.mxu0 0.0
        %280 = vmatpush1.xpose.msra.mxu0 %v256
        %281 = vmatprep.subr.mxu0 0.0
        %282 = vmatpush1.xpose.msra.mxu0 %v255
        %283 = vmatprep.subr.mxu0 0.0
        %284 = vmatpush1.xpose.msra.mxu0 %v254
        %285 = vmatprep.subr.mxu0 0.0
        %286 = vmatpush1.xpose.msra.mxu0 %v253
        %287 = vmatprep.subr.mxu0 0.0
        %288 = vmatpush1.xpose.msra.mxu0 %v252
        %289 = vmatprep.subr.mxu0 0.0
        %290 = vmatpush1.xpose.msra.mxu0 %v251
        %291 = vmatprep.subr.mxu0 0.0
        %292 = vmatpush1.xpose.msra.mxu0 %v250
        %293 = vmatprep.subr.mxu0 0.0
        %294 = vmatpush1.xpose.msra.mxu0 %v249
        %295 = vmatprep.subr.mxu0 0.0
        %296 = vmatpush1.xpose.msra.mxu0 %v248
        %297 = vmatprep.subr.mxu0 0.0
        %298 = vmatpush1.xpose.msra.mxu0 %v247
        %299 = vmatprep.subr.mxu0 0.0
        %300 = vmatpush2.xpose.msra.mxu0 0.0
        %301 = vmatprep.subr.mxu0 0.0
        %302 = vmatpush2.xpose.msra.mxu0 0.0
        %303 = vmatprep.subr.mxu0 0.0
        %304 = vmatpush2.xpose.msra.mxu0 0.0
        %305 = vmatprep.subr.mxu0 0.0
        %306 = vmatpush2.xpose.msra.mxu0 0.0
        %307 = vmatprep.subr.mxu0 0.0
        %308 = vmatpush2.xpose.msra.mxu0 0.0
        %309 = vmatprep.subr.mxu0 0.0
        %310 = vmatpush2.xpose.msra.mxu0 0.0
        %311 = vmatprep.subr.mxu0 0.0
        %312 = vmatpush2.xpose.msra.mxu0 0.0
        %313 = vmatprep.subr.mxu0 0.0
        %314 = vmatpush2.xpose.msra.mxu0 0.0
        %315 = vmatprep.subr.mxu0 0.0
        %316 = vmatpush2.xpose.msra.mxu0 0.0
        %317 = vmatprep.subr.mxu0 0.0
        %318 = vmatpush2.xpose.msra.mxu0 0.0
        %319 = vmatprep.subr.mxu0 0.0
        %320 = vmatpush2.xpose.msra.mxu0 0.0
        %321 = vmatprep.subr.mxu0 0.0
        %322 = vmatpush2.xpose.msra.mxu0 0.0
        %323 = vmatprep.subr.mxu0 0.0
        %324 = vmatpush2.xpose.msra.mxu0 0.0
        %325 = vmatprep.subr.mxu0 0.0
        %326 = vmatpush2.xpose.msra.mxu0 0.0
        %327 = vmatprep.subr.mxu0 0.0
        %328 = vmatpush2.xpose.msra.mxu0 0.0
        %329 = vmatprep.subr.mxu0 0.0
        %330 = vmatpush2.xpose.msra.mxu0 0.0
        %331 = vmatprep.mubr.f32.mxu0 0.0
        %332 = vmatmul.mubr.f32.gmra.mxu0 %v242
        %v333 = vpop.f32.mrf.mxu0
        %v334 = vadd.f32 %v266, %v333
        %v335 = vpop.f32.mrf.mxu0
        %336 = vdwg.mxu0
        %v337 = vmax.f32 %v334, 0.0
        %v338 = vld [vmem:[#allocation7] sm:$0xff]
        %v339 = vld [vmem:[#allocation7 + $0x8] sm:$0xff]
        %v340 = vld [vmem:[#allocation7 + $0x10] sm:$0xff]
        %v341 = vld [vmem:[#allocation7 + $0x18] sm:$0xff]
        %v342 = vld [vmem:[#allocation7 + $0x20] sm:$0xff]
        %v343 = vld [vmem:[#allocation7 + $0x28] sm:$0xff]
        %v344 = vld [vmem:[#allocation7 + $0x30] sm:$0xff]
        %v345 = vld [vmem:[#allocation7 + $0x38] sm:$0xff]
        %v346 = vld [vmem:[#allocation7 + $0x40] sm:$0xff]
        %v347 = vld [vmem:[#allocation7 + $0x48] sm:$0xff]
        %v348 = vld [vmem:[#allocation7 + $0x50] sm:$0xff]
        %v349 = vld [vmem:[#allocation7 + $0x58] sm:$0xff]
        %v350 = vld [vmem:[#allocation7 + $0x60] sm:$0xff]
        %v351 = vld [vmem:[#allocation7 + $0x68] sm:$0xff]
        %v352 = vld [vmem:[#allocation7 + $0x70] sm:$0xff]
        %v353 = vld [vmem:[#allocation7 + $0x78] sm:$0xff]
        %v354 = vlaneseq
        %v355 = vshrl.u32 %v354, 7
        %v356 = vsub.s32 0, %v355
        %v357 = vrot.slane %v244, %v356
        %358 = vmatprep.subr.mxu0 0.0
        %359 = vmatpush1.xpose.msra.mxu0 %v353
        %360 = vmatprep.subr.mxu0 0.0
        %361 = vmatpush1.xpose.msra.mxu0 %v352
        %362 = vmatprep.subr.mxu0 0.0
        %363 = vmatpush1.xpose.msra.mxu0 %v351
        %364 = vmatprep.subr.mxu0 0.0
        %365 = vmatpush1.xpose.msra.mxu0 %v350
        %366 = vmatprep.subr.mxu0 0.0
        %367 = vmatpush1.xpose.msra.mxu0 %v349
        %368 = vmatprep.subr.mxu0 0.0
        %369 = vmatpush1.xpose.msra.mxu0 %v348
        %370 = vmatprep.subr.mxu0 0.0
        %371 = vmatpush1.xpose.msra.mxu0 %v347
        %372 = vmatprep.subr.mxu0 0.0
        %373 = vmatpush1.xpose.msra.mxu0 %v346
        %374 = vmatprep.subr.mxu0 0.0
        %375 = vmatpush1.xpose.msra.mxu0 %v345
        %376 = vmatprep.subr.mxu0 0.0
        %377 = vmatpush1.xpose.msra.mxu0 %v344
        %378 = vmatprep.subr.mxu0 0.0
        %379 = vmatpush1.xpose.msra.mxu0 %v343
        %380 = vmatprep.subr.mxu0 0.0
        %381 = vmatpush1.xpose.msra.mxu0 %v342
        %382 = vmatprep.subr.mxu0 0.0
        %383 = vmatpush1.xpose.msra.mxu0 %v341
        %384 = vmatprep.subr.mxu0 0.0
        %385 = vmatpush1.xpose.msra.mxu0 %v340
        %386 = vmatprep.subr.mxu0 0.0
        %387 = vmatpush1.xpose.msra.mxu0 %v339
        %388 = vmatprep.subr.mxu0 0.0
        %389 = vmatpush1.xpose.msra.mxu0 %v338
        %390 = vmatprep.subr.mxu0 0.0
        %391 = vmatpush2.xpose.msra.mxu0 0.0
        %392 = vmatprep.subr.mxu0 0.0
        %393 = vmatpush2.xpose.msra.mxu0 0.0
        %394 = vmatprep.subr.mxu0 0.0
        %395 = vmatpush2.xpose.msra.mxu0 0.0
        %396 = vmatprep.subr.mxu0 0.0
        %397 = vmatpush2.xpose.msra.mxu0 0.0
        %398 = vmatprep.subr.mxu0 0.0
        %399 = vmatpush2.xpose.msra.mxu0 0.0
        %400 = vmatprep.subr.mxu0 0.0
        %401 = vmatpush2.xpose.msra.mxu0 0.0
        %402 = vmatprep.subr.mxu0 0.0
        %403 = vmatpush2.xpose.msra.mxu0 0.0
        %404 = vmatprep.subr.mxu0 0.0
        %405 = vmatpush2.xpose.msra.mxu0 0.0
        %406 = vmatprep.subr.mxu0 0.0
        %407 = vmatpush2.xpose.msra.mxu0 0.0
        %408 = vmatprep.subr.mxu0 0.0
        %409 = vmatpush2.xpose.msra.mxu0 0.0
        %410 = vmatprep.subr.mxu0 0.0
        %411 = vmatpush2.xpose.msra.mxu0 0.0
        %412 = vmatprep.subr.mxu0 0.0
        %413 = vmatpush2.xpose.msra.mxu0 0.0
        %414 = vmatprep.subr.mxu0 0.0
        %415 = vmatpush2.xpose.msra.mxu0 0.0
        %416 = vmatprep.subr.mxu0 0.0
        %417 = vmatpush2.xpose.msra.mxu0 0.0
        %418 = vmatprep.subr.mxu0 0.0
        %419 = vmatpush2.xpose.msra.mxu0 0.0
        %420 = vmatprep.subr.mxu0 0.0
        %421 = vmatpush2.xpose.msra.mxu0 0.0
        %422 = vmatprep.mubr.f32.mxu0 0.0
        %423 = vmatmul.mubr.f32.gmra.mxu0 %v337
        %v424 = vpop.f32.mrf.mxu0
        %v425 = vadd.f32 %v357, %v424
        %v426 = vpop.f32.mrf.mxu0
        %427 = vdwg.mxu0
        %v428 = vadd.f32 %v242, %v425
        %429 = vadd.xlane.f32.xlu0 %v428
        %v430 = vpop.xlane.xlu0 %429
        %v431 = vmul.f32 %v430, 0.03125
        %v432 = vsub.f32 %v428, %v431
        %v433 = vlaneseq
        %v434 = vand.u32 %v433, 127
        %vm435 = vcmp.lt.s32.totalorder %v434, 32
        %v436 = vsel %vm435, %v432, 0.0
        %v437 = vmul.f32 %v436, %v436
        %438 = vadd.xlane.f32.xlu0 %v437
        %v439 = vpop.xlane.xlu0 %438
        %v440 = vmul.f32 %v439, 0.03125
        %v441 = vadd.f32 %v440, 1e-05
        %v442 = vrsqrt.pop %v441
        %v443 = vmul.f32 %v432, %v442
        %v444 = vlaneseq
        %v445 = vshrl.u32 %v444, 7
        %v446 = vsub.s32 0, %v445
        %v447 = vrot.slane %v245, %v446
        %v448 = vmul.f32 %v443, %v447
        %v449 = vlaneseq
        %v450 = vshrl.u32 %v449, 7
        %v451 = vsub.s32 0, %v450
        %v452 = vrot.slane %v246, %v451
        %v453 = vadd.f32 %v448, %v452
        %454 = vst [vmem:[%s241] sm:$0xff] %v453
        %s455 = sand.u32 %s119, 1
        %s456 = scalar_lea.sflag [#allocation4], %s455
        %s457 = sand.u32 %s119, 1
        %s458 = smul.addr %s457, 8
        %s459 = scalar_lea.vmem [#allocation8], %s458
        // Predicated region
        $region49: #{tpu_custom_call.1} parent=35 // pred_check
          %p460 = pneg %p129
        $region50: #{tpu_custom_call.1} parent=35 // pred_check_branch
          %462 = sbr.rel (%p460) target = $region52
        $region51: #{tpu_custom_call.1} parent=35 // pred_region
          %s464 = ssub.s32 128, 128
          %465 = vsyncadd %s456, %s464
          %s466 = smul.addr %s22, 128
          %s467 = scalar_lea.hbm %s4, %s466
          %s469 = sshll.u32 %s459, 4
          %s470 = int_to_ptr.vmem [resolvable:$true] %s469
          %472 = dma.vmem_to_hbm [thread:$0]  %s470, 128, %s467, %s456
        $region52: #{tpu_custom_call.1} parent=35 // pred_fallthru
          _
      $region36: #{tpu_custom_call.1} parent=5 // pred_fallthru
        _
      %p473 = scmp.le.s32.totalorder 2, %s17
      // Predicated region
      $region53: #{tpu_custom_call.1} parent=5 // pred_check
        %p474 = pneg %p473
      $region54: #{tpu_custom_call.1} parent=5 // pred_check_branch
        %476 = sbr.rel (%p474) target = $region56
      $region55: #{tpu_custom_call.1} parent=5 // pred_region
        %s477 = ssub.s32 %s17, 2
        // Predicated region
        $region57: #{tpu_custom_call.1} parent=55 // pred_check
          %p478 = pneg %p135
        $region58: #{tpu_custom_call.1} parent=55 // pred_check_branch
          %480 = sbr.rel (%p478) target = $region60
        $region59: #{tpu_custom_call.1} parent=55 // pred_region
          %s481 = sand.u32 %s120, 1
          %s482 = scalar_lea.sflag [#allocation4], %s481
          %s483 = sand.u32 %s120, 1
          %s484 = smul.addr %s483, 8
          %s485 = scalar_lea.vmem [#allocation8], %s484
          %486 = dma.done %s482, 128
        $region60: #{tpu_custom_call.1} parent=55 // pred_fallthru
          _
      $region56: #{tpu_custom_call.1} parent=5 // pred_fallthru
        _
    $region6: #{tpu_custom_call.1} parent=1 // loop_footer
      %s21 = sadd.s32 1, %s17
    $region7: #{tpu_custom_call.1} parent=1 // loop_footer_branch
      %16 = sbr.rel target = $region3
    $region8: #{tpu_custom_call.1} parent=1 // loop_exit
      _
    %487 = vsyncpa [#allocation3], 1
    %s488 = scalar_lea.sflag [#allocation3], 1
    %489 = vsyncpa %s488, 1
    %490 = vsyncpa [#allocation6], 1
    %491 = vsyncpa [#allocation4], 1
    %s492 = scalar_lea.sflag [#allocation4], 1
    %493 = vsyncpa %s492, 1

</llo_original>
